<compile_context>
chip_gen: v5e
topology: v5e:2x2
jax: 0.10.0
libtpu: 0.0.40
codegen_flags: <defaults>
</compile_context>

<pallas_src>
import functools
from typing import NamedTuple

import jax
import jax.numpy as jnp
from jax.experimental import pallas as pl
from jax.experimental.pallas import tpu as pltpu


def _round_up(x, m):
    return ((x + m - 1) // m) * m


def _vmem_limit_bytes():
    # Generation-aware VMEM budget: ~72% of physical capacity.
    try:
        cap = int(pltpu.get_tpu_info().vmem_capacity_bytes)
    except Exception:
        cap = 64 * 2**20  # conservative fallback sized for v7x
    return int(0.72 * cap)


# ----------------------------------------------------------------------------
# Kernels
# ----------------------------------------------------------------------------
def _linear_kernel_f32(x_ref, w_ref, b_ref, o_ref):
    # x_ref: (tm, tk)   w_ref: (tk, tn)  [MXU-native, pre-transposed weight]
    # b_ref: (1, tn)    o_ref: (tm, tn) float32, VMEM-resident across K
    k = pl.program_id(2)

    @pl.when(k == 0)
    def _():
        # Fold bias into the accumulator init (output block IS the accumulator).
        o_ref[...] = jnp.broadcast_to(
            b_ref[...].astype(jnp.float32), o_ref.shape)

    o_ref[...] += jnp.dot(x_ref[...], w_ref[...],
                          preferred_element_type=jnp.float32)


def _linear_small_kernel(x_ref, w_ref, b_ref, o_ref):
    # Whole-array blocks (no grid): single MXU pass + bias add.
    acc = jnp.dot(x_ref[...], w_ref[...], preferred_element_type=jnp.float32)
    o_ref[...] = (acc + b_ref[...].astype(jnp.float32)).astype(o_ref.dtype)


# ----------------------------------------------------------------------------
# Wrapper
# ----------------------------------------------------------------------------
class _LinearConfig(NamedTuple):
    tm: int
    tn: int
    tk: int
    in_features: int
    out_features: int
    Kp: int
    Np: int


@functools.partial(jax.jit, static_argnames=("cfg", "cast_to_bf16"))
def _mlp_forward(x, wt, wt_pad, bp, b2d, *, cfg, cast_to_bf16):
    B, K = x.shape
    assert K == cfg.in_features, "input feature dim mismatch"
    tm, tn, tk = cfg.tm, cfg.tn, cfg.tk
    OUT, Kp, Np = cfg.out_features, cfg.Kp, cfg.Np
    compute_dtype = jnp.bfloat16 if cast_to_bf16 else x.dtype

    Mp = _round_up(_round_up(B, 128), tm)
    single_block = (Mp <= tm) and (Np <= tn) and (Kp <= tk)

    if single_block:
        # Small-problem fast path: no padding, no grid, whole-array blocks.
        return pl.pallas_call(
            _linear_small_kernel,
            out_shape=jax.ShapeDtypeStruct((B, OUT), jnp.float32),
        )(x.astype(compute_dtype), wt, b2d)

    # Tiled path. Only the activation is padded per call; the weight/bias were
    # padded once in make_mlp_forward. Zero padding is exact (padded K columns
    # contribute 0; padded output rows/cols are sliced off below).
    xp = jnp.zeros((Mp, Kp), compute_dtype).at[:B, :K].set(
        x.astype(compute_dtype))

    grid = (Mp // tm, Np // tn, Kp // tk)

    out_padded = pl.pallas_call(
        _linear_kernel_f32,
        out_shape=jax.ShapeDtypeStruct((Mp, Np), jnp.float32),
        grid_spec=pltpu.PrefetchScalarGridSpec(
            num_scalar_prefetch=0,
            grid=grid,
            in_specs=[
                pl.BlockSpec((tm, tk), lambda i, j, k: (i, k)),   # x tile
                pl.BlockSpec((tk, tn), lambda i, j, k: (k, j)),   # W^T tile
                pl.BlockSpec((1, tn), lambda i, j, k: (0, j)),    # bias tile
            ],
            out_specs=pl.BlockSpec((tm, tn), lambda i, j, k: (i, j)),
        ),
        compiler_params=pltpu.CompilerParams(
            dimension_semantics=("parallel", "parallel", "arbitrary"),
            vmem_limit_bytes=_vmem_limit_bytes(),
        ),
    )(xp, wt_pad, bp)

    return out_padded[:B, :OUT]


def make_mlp_forward(w, b, *, tm=512, tn=1024, tk=1024, cast_to_bf16=False):
    """Build the MLP forward (fc2 linear layer).

    w: [OUT, IN] (PyTorch nn.Linear layout), b: [OUT].
    Returns forward(x: [B, IN]) -> [B, OUT] float32.

    Weight preprocessing (transpose to MXU-native [IN, OUT], 128-aligned
    padding, optional bf16 cast) is done ONCE here -- not per forward call.
    """
    OUT, K = w.shape
    assert b.shape == (OUT,)
    param_dtype = jnp.bfloat16 if cast_to_bf16 else w.dtype

    Kp = _round_up(K, 128)
    Np = _round_up(OUT, 128)
    tn = min(tn, Np)
    tk = min(tk, Kp)
    Np = _round_up(Np, tn)
    Kp = _round_up(Kp, tk)

    # If N would be a single parallel tile but is large enough, split it so
    # v7x's second TensorCore gets work ("parallel" axes need extent >= 2).
    if Np // tn == 1 and Np % 256 == 0:
        tn = Np // 2

    # MXU-native [IN, OUT] weight: padded copy for the tiled path, unpadded
    # copy for the small-problem fast path. (A real deployment would keep only
    # the one matching its batch regime.)
    wt = jnp.asarray(w, param_dtype).T                              # [K, OUT]
    wt_pad = jnp.zeros((Kp, Np), param_dtype).at[:K, :OUT].set(wt)  # [Kp, Np]
    b2d = jnp.asarray(b, jnp.float32).reshape(1, OUT)
    bp = jnp.zeros((1, Np), jnp.float32).at[:, :OUT].set(b2d)

    cfg = _LinearConfig(tm=tm, tn=tn, tk=tk, in_features=K,
                        out_features=OUT, Kp=Kp, Np=Np)

    def forward(x):
        return _mlp_forward(x, wt, wt_pad, bp, b2d,
                            cfg=cfg, cast_to_bf16=cast_to_bf16)

    return forward


if __name__ == "__main__":
    # Small, MLP-consistent shapes (hidden_size/ReLU are unused by forward()).
    batch = 8
    input_size = 32
    hidden_size = 64
    out_classes = 16

    key = jax.random.PRNGKey(0)
    kx, kw, kb, kx2, kw2, kb2 = jax.random.split(key, 6)

    x = jax.random.normal(kx, (batch, input_size), dtype=jnp.float32)
    bound = 1.0 / (input_size ** 0.5)
    w = jax.random.uniform(kw, (out_classes, input_size),
                           minval=-bound, maxval=bound, dtype=jnp.float32)
    b = jax.random.uniform(kb, (out_classes,),
                           minval=-bound, maxval=bound, dtype=jnp.float32)

    # 1) Small-problem fast path, exact f32.
    fwd = make_mlp_forward(w, b)
    out = fwd(x)
    jax.block_until_ready(out)
    ref = jnp.dot(x, w.T, precision=jax.lax.Precision.HIGHEST) + b
    assert out.shape == ref.shape
    assert jnp.allclose(out, ref, atol=1e-5, rtol=1e-5)

    # 2) Tiled (M, N, K) path, forced via small tiles, f32.
    B2, IN2, OUT2 = 200, 300, 260
    x2 = jax.random.normal(kx2, (B2, IN2), dtype=jnp.float32)
    w2 = jax.random.uniform(kw2, (OUT2, IN2), minval=-0.05, maxval=0.05,
                            dtype=jnp.float32)
    b2 = jax.random.uniform(kb2, (OUT2,), minval=-0.05, maxval=0.05,
                            dtype=jnp.float32)
    ref2 = jnp.dot(x2, w2.T, precision=jax.lax.Precision.HIGHEST) + b2

    fwd2 = make_mlp_forward(w2, b2, tm=128, tn=128, tk=128)
    out2 = fwd2(x2)
    jax.block_until_ready(out2)
    assert out2.shape == ref2.shape
    assert jnp.allclose(out2, ref2, atol=1e-4, rtol=1e-4)

    # 3) bf16-MXU path (f32 accumulation), looser tolerance.
    fwd3 = make_mlp_forward(w2, b2, tm=128, tn=128, tk=128, cast_to_bf16=True)
    out3 = fwd3(x2)
    jax.block_until_ready(out3)
    assert jnp.allclose(out3, ref2, atol=5e-2, rtol=5e-2)

    print("KERNEL_OK")
</pallas_src>

<mosaic_0001>
module attributes {stable_mosaic.version = 11 : i64} {
  func.func @_linear_small_kernel(%arg0: memref<8x32xf32, #tpu.memory_space<vmem>>, %arg1: memref<32x16xf32, #tpu.memory_space<vmem>>, %arg2: memref<1x16xf32, #tpu.memory_space<vmem>>, %arg3: memref<8x16xf32, #tpu.memory_space<vmem>>) attributes {dimension_semantics = [], scalar_prefetch = 0 : i64, scratch_operands = 0 : i64, tpu.core_type = #tpu.core_type<tc>} {
    %c0 = arith.constant 0 : index
    %c0_0 = arith.constant 0 : index
    %0 = vector.load %arg0[%c0, %c0_0] : memref<8x32xf32, #tpu.memory_space<vmem>>, vector<8x32xf32>
    %c0_1 = arith.constant 0 : index
    %c0_2 = arith.constant 0 : index
    %1 = vector.load %arg1[%c0_1, %c0_2] : memref<32x16xf32, #tpu.memory_space<vmem>>, vector<32x16xf32>
    %cst = arith.constant dense<0.000000e+00> : vector<8x16xf32>
    %2 = tpu.matmul %0, %1, %cst {dimension_numbers = #tpu.dot_dimension_numbers<[1], [0], [0], [1], [0, 0, 1, 1], [], []>} : vector<8x32xf32>, vector<32x16xf32>, vector<8x16xf32> -> vector<8x16xf32>
    %c0_3 = arith.constant 0 : index
    %c0_4 = arith.constant 0 : index
    %3 = vector.load %arg2[%c0_3, %c0_4] : memref<1x16xf32, #tpu.memory_space<vmem>>, vector<1x16xf32>
    %4 = vector.broadcast %3 : vector<1x16xf32> to vector<8x16xf32>
    %5 = arith.addf %2, %4 : vector<8x16xf32>
    %c0_5 = arith.constant 0 : index
    %c0_6 = arith.constant 0 : index
    %6 = vector.load %arg3[%c0_5, %c0_6] : memref<8x16xf32, #tpu.memory_space<vmem>>, vector<8x16xf32>
    tpu.vector_store %arg3[%c0_5, %c0_6], %5 {strides = array<i32>} : memref<8x16xf32, #tpu.memory_space<vmem>>, vector<8x16xf32>,
    return
  }
}

</mosaic_0001>

<llo_original>
// kernel: _mlp_forward.1
$region0: #{_mlp_forward.1}
  #allocation0 [shape = 'u32[]', space=smem, size = 0x4, offset = 0x4, fixed_abs, tag = 'smem constant byte address 0x4 - core index']
  #allocation1 [shape = 'u32[72,128]{1,0:T(1,128)}', space=vmem, size = 0x9000, scoped, tag = 'internal scratch']
  %s0 = inlined_call_operand.vmem [shape: f32[8,32], index: 0, kind: input, shape index: {}]
  %s1 = inlined_call_operand.vmem [shape: f32[32,16], index: 1, kind: input, shape index: {}]
  %s2 = inlined_call_operand.vmem [shape: f32[1,16], index: 2, kind: input, shape index: {}]
  %s3 = inlined_call_operand.hbm [shape: f32[8,16], index: 3, kind: output, shape index: {}]
  %s4 = sld [smem:[#allocation0]]
  $region22: #{_mlp_forward.1} parent=0
    _
  %s6 = ssub.s32 1, %s4
  %s7 = scalar_select 0, %s6, %s4
  $region1: #{_mlp_forward.1} parent=0
    #allocation2 [shape = 'u8[4096]{0}', space=vmem, size = 0x1000, scoped, tag = 'output window, operand 0, single buffered']
    #allocation3 [shape = 's32[1]{0}', space=sflag, size = 0x4, scoped, tag = 'scoped memory for _mlp_forward.1']
    %8 = vsyncpa [#allocation3], 0
    // Predicated region
    $region2: #{_mlp_forward.1} parent=1 // pred_check
      _
    $region3: #{_mlp_forward.1} parent=1 // pred_check_branch
      %10 = sbr.rel (0) target = $region5
    $region4: #{_mlp_forward.1} parent=1 // pred_region
      _
    $region5: #{_mlp_forward.1} parent=1 // pred_fallthru
      _
    // Predicated region
    $region6: #{_mlp_forward.1} parent=1 // pred_check
      _
    $region7: #{_mlp_forward.1} parent=1 // pred_check_branch
      %12 = sbr.rel (0) target = $region9
    $region8: #{_mlp_forward.1} parent=1 // pred_region
      _
    $region9: #{_mlp_forward.1} parent=1 // pred_fallthru
      _
    // Predicated region
    $region10: #{_mlp_forward.1} parent=1 // pred_check
      _
    $region11: #{_mlp_forward.1} parent=1 // pred_check_branch
      %14 = sbr.rel (0) target = $region13
    $region12: #{_mlp_forward.1} parent=1 // pred_region
      _
    $region13: #{_mlp_forward.1} parent=1 // pred_fallthru
      _
    %v15 = vld [vmem:[%s0] sm:$0xff]
    %v16 = vld [vmem:[%s1] sm:$0xff]
    %v17 = vld [vmem:[%s1 + $0x8] sm:$0xff]
    %v18 = vld [vmem:[%s1 + $0x10] sm:$0xff]
    %v19 = vld [vmem:[%s1 + $0x18] sm:$0xff]
    %v20 = vld [vmem:[%s2] sm:$0x1]
    %v22 = vperm.slane %v20, 0
    %vm24 = vcmask 261120
    %v26 = vsel %vm24, %v15, 0
    %28 = vmatpush.msra.mxu0 0.0
    %29 = vmatpush.msra.mxu0 0.0
    %30 = vmatpush.msra.mxu0 0.0
    %31 = vmatpush.msra.mxu0 0.0
    %32 = vmatpush.msra.mxu0 0.0
    %33 = vmatpush.msra.mxu0 0.0
    %34 = vmatpush.msra.mxu0 0.0
    %35 = vmatpush.msra.mxu0 0.0
    %36 = vmatpush.msra.mxu0 0.0
    %37 = vmatpush.msra.mxu0 0.0
    %38 = vmatpush.msra.mxu0 0.0
    %39 = vmatpush.msra.mxu0 0.0
    %40 = vmatpush.msra.mxu0 %v19
    %41 = vmatpush.msra.mxu0 %v18
    %42 = vmatpush.msra.mxu0 %v17
    %43 = vmatpush.msra.mxu0 %v16
    %44 = vmatmul.f32.gmra.mxu0 %v26
    %v45 = vpop.f32.mrf.mxu0
    %v46 = vadd.f32 %v22, %v45
    %47 = vdwg.mxu0
    %vm48 = vcmask 130048
    %49 = vst.msk [vmem:[#allocation2] sm:$0xff] %vm48, %v46
    // Predicated region
    $region14: #{_mlp_forward.1} parent=1 // pred_check
      _
    $region15: #{_mlp_forward.1} parent=1 // pred_check_branch
      %51 = sbr.rel (0) target = $region17
    $region16: #{_mlp_forward.1} parent=1 // pred_region
      %53 = vsyncadd [#allocation3], 0
      %s55 = sshll.u32 [#allocation2], 4
      %s56 = int_to_ptr.vmem [resolvable:$true] %s55
      %s57 = sshll.u32 %s3, 4
      %s58 = int_to_ptr.hbm [resolvable:$true] %s57
      %60 = dma.vmem_to_hbm [thread:$0]  %s56, 128, %s58, [#allocation3]
    $region17: #{_mlp_forward.1} parent=1 // pred_fallthru
      _
    // Predicated region
    $region18: #{_mlp_forward.1} parent=1 // pred_check
      _
    $region19: #{_mlp_forward.1} parent=1 // pred_check_branch
      %62 = sbr.rel (0) target = $region21
    $region20: #{_mlp_forward.1} parent=1 // pred_region
      %64 = dma.done [#allocation3], 128
    $region21: #{_mlp_forward.1} parent=1 // pred_fallthru
      _
    %65 = vsyncpa [#allocation3], 1

</llo_original>
